<compile_context>
chip_gen: v5e
topology: v5e:2x2
jax: 0.10.0
libtpu: 0.0.40
codegen_flags: <defaults>
</compile_context>

<pallas_src>
import jax
import jax.numpy as jnp
from jax.experimental import pallas as pl
from jax.experimental.pallas import tpu as pltpu


def _round_up(v: int, m: int) -> int:
    return ((v + m - 1) // m) * m


def toy_kernel(params_ref, x_ref, o_ref):
    # params_ref (SMEM, shape (4,)): [w1, b1, w2, b2]
    w1 = params_ref[0]
    b1 = params_ref[1]
    w2 = params_ref[2]
    b2 = params_ref[3]

    x = x_ref[...]                       # (TILE_R, LANES) f32
    h = jnp.maximum(x * w1 + b1, 0.0)    # conv1 (1x1, 1->1 ch) + ReLU
    o_ref[...] = h * w2 + b2             # conv2 (1x1, 1->1 ch)


def toy_model_forward(x, w1, b1, w2, b2):
    """x: (N, 1, H, W) float32. Returns (N, 1, H, W) float32."""
    N, C, H, W = x.shape
    assert C == 1, "ToyModel uses 1-channel 1x1 convs"

    x = x.astype(jnp.float32)
    orig_shape = x.shape
    total = N * C * H * W

    # ---- lane-dense, tiled slab layout -------------------------------------
    # Last dim: large multiple of 128 (fall back to 128 for tiny inputs).
    LANES = 1024 if total >= 1024 else 128
    rows_needed = pl.cdiv(total, LANES)
    # Row tile: multiple of 8 (sublane), capped so one f32 block is ~2 MiB.
    TILE_R = min(512, _round_up(rows_needed, 8))
    rows = _round_up(rows_needed, TILE_R)
    padded_total = rows * LANES

    flat = x.reshape(-1)
    if padded_total != total:
        flat = jnp.pad(flat, (0, padded_total - total))
    x2d = flat.reshape(rows, LANES)

    params = jnp.stack(
        [w1.reshape(()), b1.reshape(()), w2.reshape(()), b2.reshape(())]
    ).astype(jnp.float32)

    grid = (rows // TILE_R,)

    out2d = pl.pallas_call(
        toy_kernel,
        out_shape=jax.ShapeDtypeStruct((rows, LANES), jnp.float32),
        grid_spec=pltpu.PrefetchScalarGridSpec(
            num_scalar_prefetch=1,          # params -> SMEM, passed first
            grid=grid,
            in_specs=[
                pl.BlockSpec((TILE_R, LANES), lambda i, params: (i, 0)),
            ],
            out_specs=pl.BlockSpec((TILE_R, LANES), lambda i, params: (i, 0)),
        ),
        compiler_params=pltpu.CompilerParams(
            dimension_semantics=("parallel",),   # shard grid across TCs (v7x)
        ),
    )(params, x2d)

    # Drop the padded tail and restore NCHW.
    out_flat = out2d.reshape(-1)[:total]
    return out_flat.reshape(orig_shape)


def reference_forward(x, w1, b1, w2, b2):
    # Pure-JAX reference of conv2(relu(conv1(x))) for 1x1 / 1-channel convs.
    h = jnp.maximum(x * w1.reshape(()) + b1.reshape(()), 0.0)
    return h * w2.reshape(()) + b2.reshape(())


if __name__ == "__main__":
    key = jax.random.PRNGKey(0)
    kx, k1, k2, k3, k4 = jax.random.split(key, 5)

    # Deterministic parameter init (Conv2d(1,1,1) -> weight (1,1,1,1), bias (1,)).
    # Mimic PyTorch's U(-1, 1) bound for fan_in=1 kernels.
    w1 = jax.random.uniform(k1, (1, 1, 1, 1), jnp.float32, -1.0, 1.0)
    b1 = jax.random.uniform(k2, (1,), jnp.float32, -1.0, 1.0)
    w2 = jax.random.uniform(k3, (1, 1, 1, 1), jnp.float32, -1.0, 1.0)
    b2 = jax.random.uniform(k4, (1,), jnp.float32, -1.0, 1.0)

    # Small NCHW input consistent with the module: batch=2, channels=1, 16x16.
    x = jax.random.normal(kx, (2, 1, 16, 16), jnp.float32)

    out = toy_model_forward(x, w1, b1, w2, b2)
    out = jax.block_until_ready(out)

    ref = reference_forward(x, w1, b1, w2, b2)
    assert out.shape == (2, 1, 16, 16)
    assert jnp.allclose(out, ref, atol=1e-5, rtol=1e-5), "mismatch vs reference"

    print("KERNEL_OK")
</pallas_src>

<mosaic_0001>
module attributes {stable_mosaic.version = 11 : i64} {
  func.func @toy_kernel(%arg0: i32, %arg1: memref<4xf32, #tpu.memory_space<smem>>, %arg2: memref<8x128xf32, #tpu.memory_space<vmem>>, %arg3: memref<8x128xf32, #tpu.memory_space<vmem>>) attributes {dimension_semantics = [#tpu.dimension_semantics<parallel>], iteration_bounds = array<i64: 1>, scalar_prefetch = 1 : i64, scratch_operands = 0 : i64, tpu.core_type = #tpu.core_type<tc>, window_params = [{transform_indices = @transform_0, window_bounds = array<i64: 8, 128>}, {transform_indices = @transform_1, window_bounds = array<i64: 8, 128>}]} {
    %c0 = arith.constant 0 : index
    %0 = memref.load %arg1[%c0] : memref<4xf32, #tpu.memory_space<smem>>
    %c1 = arith.constant 1 : index
    %1 = memref.load %arg1[%c1] : memref<4xf32, #tpu.memory_space<smem>>
    %c2 = arith.constant 2 : index
    %2 = memref.load %arg1[%c2] : memref<4xf32, #tpu.memory_space<smem>>
    %c3 = arith.constant 3 : index
    %3 = memref.load %arg1[%c3] : memref<4xf32, #tpu.memory_space<smem>>
    %c0_0 = arith.constant 0 : index
    %c0_1 = arith.constant 0 : index
    %4 = vector.load %arg2[%c0_0, %c0_1] : memref<8x128xf32, #tpu.memory_space<vmem>>, vector<8x128xf32>
    %5 = vector.broadcast %0 : f32 to vector<8x128xf32>
    %6 = arith.mulf %4, %5 : vector<8x128xf32>
    %7 = vector.broadcast %1 : f32 to vector<8x128xf32>
    %8 = arith.addf %6, %7 : vector<8x128xf32>
    %cst = arith.constant 0.000000e+00 : f32
    %9 = vector.broadcast %cst : f32 to vector<8x128xf32>
    %10 = arith.maximumf %8, %9 : vector<8x128xf32>
    %11 = vector.broadcast %2 : f32 to vector<8x128xf32>
    %12 = arith.mulf %10, %11 : vector<8x128xf32>
    %13 = vector.broadcast %3 : f32 to vector<8x128xf32>
    %14 = arith.addf %12, %13 : vector<8x128xf32>
    %c0_2 = arith.constant 0 : index
    %c0_3 = arith.constant 0 : index
    %15 = vector.load %arg3[%c0_2, %c0_3] : memref<8x128xf32, #tpu.memory_space<vmem>>, vector<8x128xf32>
    tpu.vector_store %arg3[%c0_2, %c0_3], %14 {strides = array<i32>} : memref<8x128xf32, #tpu.memory_space<vmem>>, vector<8x128xf32>,
    return
  }
  func.func @transform_0(%arg0: i32, %arg1: memref<4xf32, #tpu.memory_space<smem>>) -> (i32, i32) {
    %c0_i32 = arith.constant 0 : i32
    %c0_i32_0 = arith.constant 0 : i32
    return %arg0, %c0_i32 : i32, i32
  }
  func.func @transform_1(%arg0: i32, %arg1: memref<4xf32, #tpu.memory_space<smem>>) -> (i32, i32) {
    %c0_i32 = arith.constant 0 : i32
    %c0_i32_0 = arith.constant 0 : i32
    return %arg0, %c0_i32 : i32, i32
  }
}

</mosaic_0001>

<llo_original>
// kernel: tpu_custom_call.1
$region0: #{tpu_custom_call.1}
  #allocation0 [shape = 'u32[]', space=smem, size = 0x4, offset = 0x4, fixed_abs, tag = 'smem constant byte address 0x4 - core index']
  #allocation1 [shape = 'u32[72,128]{1,0:T(1,128)}', space=vmem, size = 0x9000, scoped, tag = 'internal scratch']
  #allocation2 [shape = 's32[1]{0}', space=sflag, size = 0x4, scoped, tag = 'scoped memory for tpu_custom_call.1']
  #allocation3 [shape = 'u8[512]{0}', space=smem, size = 0x200, scoped, tag = 'prefetched SMEM operand 0']
  %s0 = inlined_call_operand.hbm [shape: f32[4], index: 0, kind: input, shape index: {}]
  %s1 = inlined_call_operand.hbm [shape: f32[8,128], index: 1, kind: input, shape index: {}]
  %s2 = inlined_call_operand.hbm [shape: f32[8,128], index: 2, kind: output, shape index: {}]
  %s3 = sld [smem:[#allocation0]]
  $region18: #{tpu_custom_call.1} parent=0
    _
  %s5 = ssub.s32 1, %s3
  %s6 = scalar_select 0, %s5, %s3
  %s8 = sshll.u32 %s0, 4
  %s9 = int_to_ptr.hbm [resolvable:$true] %s8
  %11 = dma.hbm_to_smem %s9, 16, [#allocation3], [#allocation2]
  %13 = dma.done [#allocation2], 16
  %14 = sfence
  $region1: #{tpu_custom_call.1} parent=0
    #allocation4 [shape = 'u8[4096]{0}', space=vmem, size = 0x1000, scoped, tag = 'input window, operand 1, single buffered']
    #allocation5 [shape = 's32[1]{0}', space=sflag, size = 0x4, scoped, tag = 'scoped memory for tpu_custom_call.1']
    #allocation6 [shape = 's32[1]{0}', space=sflag, size = 0x4, scoped, tag = 'scoped memory for tpu_custom_call.1']
    #allocation7 [shape = 'u8[4096]{0}', space=vmem, size = 0x1000, scoped, tag = 'output window, operand 0, single buffered']
    %15 = vsyncpa [#allocation5], 0
    %16 = vsyncpa [#allocation6], 0
    // Predicated region
    $region2: #{tpu_custom_call.1} parent=1 // pred_check
      _
    $region3: #{tpu_custom_call.1} parent=1 // pred_check_branch
      %18 = sbr.rel (0) target = $region5
    $region4: #{tpu_custom_call.1} parent=1 // pred_region
      %20 = vsyncadd [#allocation5], 0
      %s22 = sshll.u32 %s1, 4
      %s23 = int_to_ptr.hbm [resolvable:$true] %s22
      %s24 = sshll.u32 [#allocation4], 4
      %s25 = int_to_ptr.vmem [resolvable:$true] %s24
      %27 = dma.hbm_to_vmem [thread:$0]  %s23, 128, %s25, [#allocation5]
    $region5: #{tpu_custom_call.1} parent=1 // pred_fallthru
      _
    // Predicated region
    $region6: #{tpu_custom_call.1} parent=1 // pred_check
      _
    $region7: #{tpu_custom_call.1} parent=1 // pred_check_branch
      %29 = sbr.rel (0) target = $region9
    $region8: #{tpu_custom_call.1} parent=1 // pred_region
      %31 = dma.done [#allocation5], 128
    $region9: #{tpu_custom_call.1} parent=1 // pred_fallthru
      _
    %s32 = sld [smem:[#allocation3]]
    %s33 = sld [smem:[#allocation3 + $0x1]]
    %s34 = sld [smem:[#allocation3 + $0x2]]
    %s35 = sld [smem:[#allocation3 + $0x3]]
    %v36 = vld [vmem:[#allocation4] sm:$0xff]
    %v37 = vstv %s32
    %v38 = vmul.f32 %v36, %v37
    %v39 = vstv %s33
    %v40 = vadd.f32 %v38, %v39
    %v41 = vmax.f32 %v40, 0.0
    %v42 = vstv %s34
    %v43 = vmul.f32 %v41, %v42
    %v44 = vstv %s35
    %v45 = vadd.f32 %v43, %v44
    %46 = vst [vmem:[#allocation7] sm:$0xff] %v45
    // Predicated region
    $region10: #{tpu_custom_call.1} parent=1 // pred_check
      _
    $region11: #{tpu_custom_call.1} parent=1 // pred_check_branch
      %48 = sbr.rel (0) target = $region13
    $region12: #{tpu_custom_call.1} parent=1 // pred_region
      %50 = vsyncadd [#allocation6], 0
      %s52 = sshll.u32 [#allocation7], 4
      %s53 = int_to_ptr.vmem [resolvable:$true] %s52
      %s54 = sshll.u32 %s2, 4
      %s55 = int_to_ptr.hbm [resolvable:$true] %s54
      %57 = dma.vmem_to_hbm [thread:$0]  %s53, 128, %s55, [#allocation6]
    $region13: #{tpu_custom_call.1} parent=1 // pred_fallthru
      _
    // Predicated region
    $region14: #{tpu_custom_call.1} parent=1 // pred_check
      _
    $region15: #{tpu_custom_call.1} parent=1 // pred_check_branch
      %59 = sbr.rel (0) target = $region17
    $region16: #{tpu_custom_call.1} parent=1 // pred_region
      %61 = dma.done [#allocation6], 128
    $region17: #{tpu_custom_call.1} parent=1 // pred_fallthru
      _
    %62 = vsyncpa [#allocation5], 1
    %63 = vsyncpa [#allocation6], 1

</llo_original>
